<compile_context>
chip_gen: v7x
topology: tpu7x:2x2x1
jax: 0.10.0
libtpu: 0.0.40
codegen_flags: <defaults>
</compile_context>

<pallas_src>
import functools

import jax
import jax.numpy as jnp
from jax.experimental import pallas as pl
from jax.experimental.pallas import tpu as pltpu


def rnn_kernel(embs_ref, w_ih_ref, bias_ref, w_hh_ref, w_out_ref, b_out_ref,
               out_ref, *, seq_len, batch, hidden_dim):
    """Hoisted input projection + unrolled LSTM recurrence + fused output head."""
    H = hidden_dim
    B = batch

    # Hoisted input projection for ALL timesteps: one (S*B, D) x (D, 4H) matmul
    # with the pre-folded bias (b_ih + b_hh) added once.
    xg = (jnp.dot(embs_ref[...], w_ih_ref[...],
                  preferred_element_type=jnp.float32)
          + bias_ref[...])                                  # (S*B, 4H)

    w_hh = w_hh_ref[...]                                     # (H, 4H), stays in vregs

    # h / c carried as loop values (vregs): no VMEM store->load on the chain.
    h = jnp.zeros((B, H), jnp.float32)
    c = jnp.zeros((B, H), jnp.float32)

    # Fully unrolled static time loop (seq_len is a Python int at trace time).
    for i in range(seq_len):
        gates = xg[i * B:(i + 1) * B, :] + jnp.dot(
            h, w_hh, preferred_element_type=jnp.float32)     # (B, 4H)

        # Two full-vreg EUP passes (sigmoid + tanh on the whole gates tile)
        # instead of four narrow per-gate passes.
        sig = jax.nn.sigmoid(gates)
        tnh = jnp.tanh(gates)

        # PyTorch chunk order: input, forget, cell, output.
        input_gate = sig[:, 0:H]
        forget_gate = sig[:, H:2 * H]
        cell_gate = tnh[:, 2 * H:3 * H]
        output_gate = sig[:, 3 * H:4 * H]

        c = forget_gate * c + input_gate * cell_gate
        h = output_gate * jnp.tanh(c)

    # Both heads fused into one lane-dense (128-padded) matmul + store.
    out_ref[...] = (jnp.dot(h, w_out_ref[...],
                            preferred_element_type=jnp.float32)
                    + b_out_ref[...])


def rnn_forward(inputs, directions, params, *, hidden_dim):
    """Full RNN.forward (non-rand branch). Gathers/concat/splits are JAX glue;
    the LSTM loop + fused output heads run in one Pallas call."""
    # Embedding lookups (gather) — glue, stays in plain JAX.
    link_embs = params["link_emb"][inputs]                   # (B, S, edge_dim)
    # The PyTorch reference indexes with (directions - 1); matched exactly.
    direction_embs = params["dir_emb"][directions - 1]       # (B, S, direction_dim)
    embs = jnp.concatenate((link_embs, direction_embs), axis=-1).astype(jnp.float32)

    B, S, D = embs.shape
    H = hidden_dim

    # Time-major flatten: rows i*B:(i+1)*B of embs_flat are timestep i.
    embs_flat = jnp.transpose(embs, (1, 0, 2)).reshape(S * B, D)

    w_ih_t = params["w_ih"].T.astype(jnp.float32)            # (D, 4H)
    w_hh_t = params["w_hh"].T.astype(jnp.float32)            # (H, 4H)
    bias = (params["b_ih"] + params["b_hh"])[None, :].astype(jnp.float32)  # (1, 4H)

    # Fuse the two heads into one weight; pad output dim to a multiple of 128
    # lanes so the kernel's final store is unmasked / lane-dense.
    w_link_t = params["w_link"].T.astype(jnp.float32)        # (H, n_link)
    w_dir_t = params["w_dir"].T.astype(jnp.float32)          # (H, n_dir)
    n_link = w_link_t.shape[1]
    n_dir = w_dir_t.shape[1]
    n_out = n_link + n_dir
    n_out_pad = max(128, ((n_out + 127) // 128) * 128)

    w_out = jnp.zeros((H, n_out_pad), jnp.float32)
    w_out = w_out.at[:, :n_link].set(w_link_t)
    w_out = w_out.at[:, n_link:n_out].set(w_dir_t)
    b_out = jnp.zeros((1, n_out_pad), jnp.float32)
    b_out = b_out.at[0, :n_link].set(params["b_link"].astype(jnp.float32))
    b_out = b_out.at[0, n_link:n_out].set(params["b_dir"].astype(jnp.float32))

    vmem = pl.BlockSpec(memory_space=pltpu.MemorySpace.VMEM)

    # Advisory cost estimate (matmuls + gate elementwise + transcendentals).
    flops = (2 * S * B * D * 4 * H            # hoisted input projection
             + 2 * S * B * H * 4 * H          # per-step h @ W_hh
             + 6 * S * B * H                  # c/h elementwise updates
             + 2 * B * H * n_out_pad)         # fused output heads
    transcendentals = S * B * (2 * 4 * H + H)
    bytes_accessed = 4 * (embs_flat.size + w_ih_t.size + bias.size
                          + w_hh_t.size + w_out.size + b_out.size
                          + B * n_out_pad)

    kernel = functools.partial(rnn_kernel, seq_len=S, batch=B, hidden_dim=H)

    out = pl.pallas_call(
        kernel,
        out_shape=jax.ShapeDtypeStruct((B, n_out_pad), jnp.float32),
        in_specs=[vmem] * 6,
        out_specs=vmem,
        cost_estimate=pl.CostEstimate(
            flops=flops,
            transcendentals=transcendentals,
            bytes_accessed=bytes_accessed),
    )(embs_flat, w_ih_t, bias, w_hh_t, w_out, b_out)

    pred = out[:, :n_link]                    # (B, num_edges * pre_len)
    pred_d = out[:, n_link:n_link + n_dir]    # (B, direction * pre_len)
    return pred, pred_d, 0


def init_params(key, *, num_edges, edge_dim, direction, direction_dim,
                hidden_dim, pre_len):
    """Deterministic synthetic parameter init mirroring the module's shapes.
    (stdv = 1/sqrt(64) is hard-coded in the reference LSTMCell.reset_parameters.)"""
    keys = jax.random.split(key, 10)
    input_dim = edge_dim + direction_dim
    stdv = 1.0 / jnp.sqrt(64.0)               # matches reference reset_parameters
    lin_bound = 1.0 / jnp.sqrt(jnp.float32(hidden_dim))

    link_emb = jax.random.normal(keys[0], (num_edges + 1, edge_dim), jnp.float32)
    link_emb = link_emb.at[0].set(0.0)        # padding_idx=0
    dir_emb = jax.random.normal(keys[1], (direction + 1, direction_dim), jnp.float32)
    dir_emb = dir_emb.at[0].set(0.0)          # padding_idx=0

    def unif(k, shape, bound):
        return jax.random.uniform(k, shape, jnp.float32, -bound, bound)

    params = {
        "link_emb": link_emb,
        "dir_emb": dir_emb,
        "w_ih": unif(keys[2], (4 * hidden_dim, input_dim), stdv),
        "b_ih": unif(keys[3], (4 * hidden_dim,), stdv),
        "w_hh": unif(keys[4], (4 * hidden_dim, hidden_dim), stdv),
        "b_hh": unif(keys[5], (4 * hidden_dim,), stdv),
        "w_link": unif(keys[6], (num_edges * pre_len, hidden_dim), lin_bound),
        "b_link": unif(keys[7], (num_edges * pre_len,), lin_bound),
        "w_dir": unif(keys[8], (direction * pre_len, hidden_dim), lin_bound),
        "b_dir": unif(keys[9], (direction * pre_len,), lin_bound),
    }
    return params


if __name__ == "__main__":
    # Small, forward-consistent config.
    batch_size = 8
    seq_len = 8
    num_edges = 16
    edge_dim = 16
    direction = 8
    direction_dim = 16
    hidden_dim = 32
    pre_len = 4

    key = jax.random.PRNGKey(0)
    k_param, k_in, k_dir = jax.random.split(key, 3)

    params = init_params(
        k_param, num_edges=num_edges, edge_dim=edge_dim, direction=direction,
        direction_dim=direction_dim, hidden_dim=hidden_dim, pre_len=pre_len)

    # inputs: edge ids in [1, num_edges]; directions in [1, direction]
    inputs = jax.random.randint(k_in, (batch_size, seq_len), 1, num_edges + 1)
    directions = jax.random.randint(k_dir, (batch_size, seq_len), 1, direction + 1)
    # mask is unused by the reference forward.
    # TODO(synk): nn.Dropout is constructed in __init__ but never applied in forward; omitted.

    pred, pred_d, zero = rnn_forward(inputs, directions, params,
                                     hidden_dim=hidden_dim)
    jax.block_until_ready((pred, pred_d))

    assert pred.shape == (batch_size, num_edges * pre_len)
    assert pred_d.shape == (batch_size, direction * pre_len)
    assert zero == 0
    print("KERNEL_OK")
</pallas_src>

<mosaic_0001>
module attributes {stable_mosaic.version = 11 : i64} {
  func.func @rnn_kernel(%arg0: memref<64x32xf32, #tpu.memory_space<vmem>>, %arg1: memref<32x128xf32, #tpu.memory_space<vmem>>, %arg2: memref<1x128xf32, #tpu.memory_space<vmem>>, %arg3: memref<32x128xf32, #tpu.memory_space<vmem>>, %arg4: memref<32x128xf32, #tpu.memory_space<vmem>>, %arg5: memref<1x128xf32, #tpu.memory_space<vmem>>, %arg6: memref<8x128xf32, #tpu.memory_space<vmem>>) attributes {dimension_semantics = [], scalar_prefetch = 0 : i64, scratch_operands = 0 : i64, tpu.core_type = #tpu.core_type<tc>} {
    %c0 = arith.constant 0 : index
    %c0_0 = arith.constant 0 : index
    %0 = vector.load %arg0[%c0, %c0_0] : memref<64x32xf32, #tpu.memory_space<vmem>>, vector<64x32xf32>
    %c0_1 = arith.constant 0 : index
    %c0_2 = arith.constant 0 : index
    %1 = vector.load %arg1[%c0_1, %c0_2] : memref<32x128xf32, #tpu.memory_space<vmem>>, vector<32x128xf32>
    %cst = arith.constant dense<0.000000e+00> : vector<64x128xf32>
    %2 = tpu.matmul %0, %1, %cst {dimension_numbers = #tpu.dot_dimension_numbers<[1], [0], [0], [1], [0, 0, 1, 1], [], []>} : vector<64x32xf32>, vector<32x128xf32>, vector<64x128xf32> -> vector<64x128xf32>
    %c0_3 = arith.constant 0 : index
    %c0_4 = arith.constant 0 : index
    %3 = vector.load %arg2[%c0_3, %c0_4] : memref<1x128xf32, #tpu.memory_space<vmem>>, vector<1x128xf32>
    %4 = vector.broadcast %3 : vector<1x128xf32> to vector<64x128xf32>
    %5 = arith.addf %2, %4 : vector<64x128xf32>
    %c0_5 = arith.constant 0 : index
    %c0_6 = arith.constant 0 : index
    %6 = vector.load %arg3[%c0_5, %c0_6] : memref<32x128xf32, #tpu.memory_space<vmem>>, vector<32x128xf32>
    %cst_7 = arith.constant 0.000000e+00 : f32
    %7 = vector.broadcast %cst_7 : f32 to vector<8x32xf32>
    %cst_8 = arith.constant 0.000000e+00 : f32
    %8 = vector.broadcast %cst_8 : f32 to vector<8x32xf32>
    %9 = vector.extract_strided_slice %5 {offsets = [0, 0], sizes = [8, 128], strides = [1, 1]} : vector<64x128xf32> to vector<8x128xf32>
    %cst_9 = arith.constant dense<0.000000e+00> : vector<8x128xf32>
    %10 = tpu.matmul %7, %6, %cst_9 {dimension_numbers = #tpu.dot_dimension_numbers<[1], [0], [0], [1], [0, 0, 1, 1], [], []>} : vector<8x32xf32>, vector<32x128xf32>, vector<8x128xf32> -> vector<8x128xf32>
    %11 = arith.addf %9, %10 : vector<8x128xf32>
    %12 = arith.negf %11 : vector<8x128xf32>
    %13 = math.exp %12 : vector<8x128xf32>
    %cst_10 = arith.constant 1.000000e+00 : f32
    %14 = vector.broadcast %cst_10 : f32 to vector<8x128xf32>
    %15 = arith.addf %14, %13 : vector<8x128xf32>
    %16 = arith.divf %14, %15 : vector<8x128xf32>
    %17 = math.tanh %11 : vector<8x128xf32>
    %18 = vector.extract_strided_slice %16 {offsets = [0, 0], sizes = [8, 32], strides = [1, 1]} : vector<8x128xf32> to vector<8x32xf32>
    %19 = vector.extract_strided_slice %16 {offsets = [0, 32], sizes = [8, 32], strides = [1, 1]} : vector<8x128xf32> to vector<8x32xf32>
    %20 = vector.extract_strided_slice %17 {offsets = [0, 64], sizes = [8, 32], strides = [1, 1]} : vector<8x128xf32> to vector<8x32xf32>
    %21 = vector.extract_strided_slice %16 {offsets = [0, 96], sizes = [8, 32], strides = [1, 1]} : vector<8x128xf32> to vector<8x32xf32>
    %22 = arith.mulf %19, %8 : vector<8x32xf32>
    %23 = arith.mulf %18, %20 : vector<8x32xf32>
    %24 = arith.addf %22, %23 : vector<8x32xf32>
    %25 = math.tanh %24 : vector<8x32xf32>
    %26 = arith.mulf %21, %25 : vector<8x32xf32>
    %27 = vector.extract_strided_slice %5 {offsets = [8, 0], sizes = [8, 128], strides = [1, 1]} : vector<64x128xf32> to vector<8x128xf32>
    %cst_11 = arith.constant dense<0.000000e+00> : vector<8x128xf32>
    %28 = tpu.matmul %26, %6, %cst_11 {dimension_numbers = #tpu.dot_dimension_numbers<[1], [0], [0], [1], [0, 0, 1, 1], [], []>} : vector<8x32xf32>, vector<32x128xf32>, vector<8x128xf32> -> vector<8x128xf32>
    %29 = arith.addf %27, %28 : vector<8x128xf32>
    %30 = arith.negf %29 : vector<8x128xf32>
    %31 = math.exp %30 : vector<8x128xf32>
    %cst_12 = arith.constant 1.000000e+00 : f32
    %32 = vector.broadcast %cst_12 : f32 to vector<8x128xf32>
    %33 = arith.addf %32, %31 : vector<8x128xf32>
    %34 = arith.divf %32, %33 : vector<8x128xf32>
    %35 = math.tanh %29 : vector<8x128xf32>
    %36 = vector.extract_strided_slice %34 {offsets = [0, 0], sizes = [8, 32], strides = [1, 1]} : vector<8x128xf32> to vector<8x32xf32>
    %37 = vector.extract_strided_slice %34 {offsets = [0, 32], sizes = [8, 32], strides = [1, 1]} : vector<8x128xf32> to vector<8x32xf32>
    %38 = vector.extract_strided_slice %35 {offsets = [0, 64], sizes = [8, 32], strides = [1, 1]} : vector<8x128xf32> to vector<8x32xf32>
    %39 = vector.extract_strided_slice %34 {offsets = [0, 96], sizes = [8, 32], strides = [1, 1]} : vector<8x128xf32> to vector<8x32xf32>
    %40 = arith.mulf %37, %24 : vector<8x32xf32>
    %41 = arith.mulf %36, %38 : vector<8x32xf32>
    %42 = arith.addf %40, %41 : vector<8x32xf32>
    %43 = math.tanh %42 : vector<8x32xf32>
    %44 = arith.mulf %39, %43 : vector<8x32xf32>
    %45 = vector.extract_strided_slice %5 {offsets = [16, 0], sizes = [8, 128], strides = [1, 1]} : vector<64x128xf32> to vector<8x128xf32>
    %cst_13 = arith.constant dense<0.000000e+00> : vector<8x128xf32>
    %46 = tpu.matmul %44, %6, %cst_13 {dimension_numbers = #tpu.dot_dimension_numbers<[1], [0], [0], [1], [0, 0, 1, 1], [], []>} : vector<8x32xf32>, vector<32x128xf32>, vector<8x128xf32> -> vector<8x128xf32>
    %47 = arith.addf %45, %46 : vector<8x128xf32>
    %48 = arith.negf %47 : vector<8x128xf32>
    %49 = math.exp %48 : vector<8x128xf32>
    %cst_14 = arith.constant 1.000000e+00 : f32
    %50 = vector.broadcast %cst_14 : f32 to vector<8x128xf32>
    %51 = arith.addf %50, %49 : vector<8x128xf32>
    %52 = arith.divf %50, %51 : vector<8x128xf32>
    %53 = math.tanh %47 : vector<8x128xf32>
    %54 = vector.extract_strided_slice %52 {offsets = [0, 0], sizes = [8, 32], strides = [1, 1]} : vector<8x128xf32> to vector<8x32xf32>
    %55 = vector.extract_strided_slice %52 {offsets = [0, 32], sizes = [8, 32], strides = [1, 1]} : vector<8x128xf32> to vector<8x32xf32>
    %56 = vector.extract_strided_slice %53 {offsets = [0, 64], sizes = [8, 32], strides = [1, 1]} : vector<8x128xf32> to vector<8x32xf32>
    %57 = vector.extract_strided_slice %52 {offsets = [0, 96], sizes = [8, 32], strides = [1, 1]} : vector<8x128xf32> to vector<8x32xf32>
    %58 = arith.mulf %55, %42 : vector<8x32xf32>
    %59 = arith.mulf %54, %56 : vector<8x32xf32>
    %60 = arith.addf %58, %59 : vector<8x32xf32>
    %61 = math.tanh %60 : vector<8x32xf32>
    %62 = arith.mulf %57, %61 : vector<8x32xf32>
    %63 = vector.extract_strided_slice %5 {offsets = [24, 0], sizes = [8, 128], strides = [1, 1]} : vector<64x128xf32> to vector<8x128xf32>
    %cst_15 = arith.constant dense<0.000000e+00> : vector<8x128xf32>
    %64 = tpu.matmul %62, %6, %cst_15 {dimension_numbers = #tpu.dot_dimension_numbers<[1], [0], [0], [1], [0, 0, 1, 1], [], []>} : vector<8x32xf32>, vector<32x128xf32>, vector<8x128xf32> -> vector<8x128xf32>
    %65 = arith.addf %63, %64 : vector<8x128xf32>
    %66 = arith.negf %65 : vector<8x128xf32>
    %67 = math.exp %66 : vector<8x128xf32>
    %cst_16 = arith.constant 1.000000e+00 : f32
    %68 = vector.broadcast %cst_16 : f32 to vector<8x128xf32>
    %69 = arith.addf %68, %67 : vector<8x128xf32>
    %70 = arith.divf %68, %69 : vector<8x128xf32>
    %71 = math.tanh %65 : vector<8x128xf32>
    %72 = vector.extract_strided_slice %70 {offsets = [0, 0], sizes = [8, 32], strides = [1, 1]} : vector<8x128xf32> to vector<8x32xf32>
    %73 = vector.extract_strided_slice %70 {offsets = [0, 32], sizes = [8, 32], strides = [1, 1]} : vector<8x128xf32> to vector<8x32xf32>
    %74 = vector.extract_strided_slice %71 {offsets = [0, 64], sizes = [8, 32], strides = [1, 1]} : vector<8x128xf32> to vector<8x32xf32>
    %75 = vector.extract_strided_slice %70 {offsets = [0, 96], sizes = [8, 32], strides = [1, 1]} : vector<8x128xf32> to vector<8x32xf32>
    %76 = arith.mulf %73, %60 : vector<8x32xf32>
    %77 = arith.mulf %72, %74 : vector<8x32xf32>
    %78 = arith.addf %76, %77 : vector<8x32xf32>
    %79 = math.tanh %78 : vector<8x32xf32>
    %80 = arith.mulf %75, %79 : vector<8x32xf32>
    %81 = vector.extract_strided_slice %5 {offsets = [32, 0], sizes = [8, 128], strides = [1, 1]} : vector<64x128xf32> to vector<8x128xf32>
    %cst_17 = arith.constant dense<0.000000e+00> : vector<8x128xf32>
    %82 = tpu.matmul %80, %6, %cst_17 {dimension_numbers = #tpu.dot_dimension_numbers<[1], [0], [0], [1], [0, 0, 1, 1], [], []>} : vector<8x32xf32>, vector<32x128xf32>, vector<8x128xf32> -> vector<8x128xf32>
    %83 = arith.addf %81, %82 : vector<8x128xf32>
    %84 = arith.negf %83 : vector<8x128xf32>
    %85 = math.exp %84 : vector<8x128xf32>
    %cst_18 = arith.constant 1.000000e+00 : f32
    %86 = vector.broadcast %cst_18 : f32 to vector<8x128xf32>
    %87 = arith.addf %86, %85 : vector<8x128xf32>
    %88 = arith.divf %86, %87 : vector<8x128xf32>
    %89 = math.tanh %83 : vector<8x128xf32>
    %90 = vector.extract_strided_slice %88 {offsets = [0, 0], sizes = [8, 32], strides = [1, 1]} : vector<8x128xf32> to vector<8x32xf32>
    %91 = vector.extract_strided_slice %88 {offsets = [0, 32], sizes = [8, 32], strides = [1, 1]} : vector<8x128xf32> to vector<8x32xf32>
    %92 = vector.extract_strided_slice %89 {offsets = [0, 64], sizes = [8, 32], strides = [1, 1]} : vector<8x128xf32> to vector<8x32xf32>
    %93 = vector.extract_strided_slice %88 {offsets = [0, 96], sizes = [8, 32], strides = [1, 1]} : vector<8x128xf32> to vector<8x32xf32>
    %94 = arith.mulf %91, %78 : vector<8x32xf32>
    %95 = arith.mulf %90, %92 : vector<8x32xf32>
    %96 = arith.addf %94, %95 : vector<8x32xf32>
    %97 = math.tanh %96 : vector<8x32xf32>
    %98 = arith.mulf %93, %97 : vector<8x32xf32>
    %99 = vector.extract_strided_slice %5 {offsets = [40, 0], sizes = [8, 128], strides = [1, 1]} : vector<64x128xf32> to vector<8x128xf32>
    %cst_19 = arith.constant dense<0.000000e+00> : vector<8x128xf32>
    %100 = tpu.matmul %98, %6, %cst_19 {dimension_numbers = #tpu.dot_dimension_numbers<[1], [0], [0], [1], [0, 0, 1, 1], [], []>} : vector<8x32xf32>, vector<32x128xf32>, vector<8x128xf32> -> vector<8x128xf32>
    %101 = arith.addf %99, %100 : vector<8x128xf32>
    %102 = arith.negf %101 : vector<8x128xf32>
    %103 = math.exp %102 : vector<8x128xf32>
    %cst_20 = arith.constant 1.000000e+00 : f32
    %104 = vector.broadcast %cst_20 : f32 to vector<8x128xf32>
    %105 = arith.addf %104, %103 : vector<8x128xf32>
    %106 = arith.divf %104, %105 : vector<8x128xf32>
    %107 = math.tanh %101 : vector<8x128xf32>
    %108 = vector.extract_strided_slice %106 {offsets = [0, 0], sizes = [8, 32], strides = [1, 1]} : vector<8x128xf32> to vector<8x32xf32>
    %109 = vector.extract_strided_slice %106 {offsets = [0, 32], sizes = [8, 32], strides = [1, 1]} : vector<8x128xf32> to vector<8x32xf32>
    %110 = vector.extract_strided_slice %107 {offsets = [0, 64], sizes = [8, 32], strides = [1, 1]} : vector<8x128xf32> to vector<8x32xf32>
    %111 = vector.extract_strided_slice %106 {offsets = [0, 96], sizes = [8, 32], strides = [1, 1]} : vector<8x128xf32> to vector<8x32xf32>
    %112 = arith.mulf %109, %96 : vector<8x32xf32>
    %113 = arith.mulf %108, %110 : vector<8x32xf32>
    %114 = arith.addf %112, %113 : vector<8x32xf32>
    %115 = math.tanh %114 : vector<8x32xf32>
    %116 = arith.mulf %111, %115 : vector<8x32xf32>
    %117 = vector.extract_strided_slice %5 {offsets = [48, 0], sizes = [8, 128], strides = [1, 1]} : vector<64x128xf32> to vector<8x128xf32>
    %cst_21 = arith.constant dense<0.000000e+00> : vector<8x128xf32>
    %118 = tpu.matmul %116, %6, %cst_21 {dimension_numbers = #tpu.dot_dimension_numbers<[1], [0], [0], [1], [0, 0, 1, 1], [], []>} : vector<8x32xf32>, vector<32x128xf32>, vector<8x128xf32> -> vector<8x128xf32>
    %119 = arith.addf %117, %118 : vector<8x128xf32>
    %120 = arith.negf %119 : vector<8x128xf32>
    %121 = math.exp %120 : vector<8x128xf32>
    %cst_22 = arith.constant 1.000000e+00 : f32
    %122 = vector.broadcast %cst_22 : f32 to vector<8x128xf32>
    %123 = arith.addf %122, %121 : vector<8x128xf32>
    %124 = arith.divf %122, %123 : vector<8x128xf32>
    %125 = math.tanh %119 : vector<8x128xf32>
    %126 = vector.extract_strided_slice %124 {offsets = [0, 0], sizes = [8, 32], strides = [1, 1]} : vector<8x128xf32> to vector<8x32xf32>
    %127 = vector.extract_strided_slice %124 {offsets = [0, 32], sizes = [8, 32], strides = [1, 1]} : vector<8x128xf32> to vector<8x32xf32>
    %128 = vector.extract_strided_slice %125 {offsets = [0, 64], sizes = [8, 32], strides = [1, 1]} : vector<8x128xf32> to vector<8x32xf32>
    %129 = vector.extract_strided_slice %124 {offsets = [0, 96], sizes = [8, 32], strides = [1, 1]} : vector<8x128xf32> to vector<8x32xf32>
    %130 = arith.mulf %127, %114 : vector<8x32xf32>
    %131 = arith.mulf %126, %128 : vector<8x32xf32>
    %132 = arith.addf %130, %131 : vector<8x32xf32>
    %133 = math.tanh %132 : vector<8x32xf32>
    %134 = arith.mulf %129, %133 : vector<8x32xf32>
    %135 = vector.extract_strided_slice %5 {offsets = [56, 0], sizes = [8, 128], strides = [1, 1]} : vector<64x128xf32> to vector<8x128xf32>
    %cst_23 = arith.constant dense<0.000000e+00> : vector<8x128xf32>
    %136 = tpu.matmul %134, %6, %cst_23 {dimension_numbers = #tpu.dot_dimension_numbers<[1], [0], [0], [1], [0, 0, 1, 1], [], []>} : vector<8x32xf32>, vector<32x128xf32>, vector<8x128xf32> -> vector<8x128xf32>
    %137 = arith.addf %135, %136 : vector<8x128xf32>
    %138 = arith.negf %137 : vector<8x128xf32>
    %139 = math.exp %138 : vector<8x128xf32>
    %cst_24 = arith.constant 1.000000e+00 : f32
    %140 = vector.broadcast %cst_24 : f32 to vector<8x128xf32>
    %141 = arith.addf %140, %139 : vector<8x128xf32>
    %142 = arith.divf %140, %141 : vector<8x128xf32>
    %143 = math.tanh %137 : vector<8x128xf32>
    %144 = vector.extract_strided_slice %142 {offsets = [0, 0], sizes = [8, 32], strides = [1, 1]} : vector<8x128xf32> to vector<8x32xf32>
    %145 = vector.extract_strided_slice %142 {offsets = [0, 32], sizes = [8, 32], strides = [1, 1]} : vector<8x128xf32> to vector<8x32xf32>
    %146 = vector.extract_strided_slice %143 {offsets = [0, 64], sizes = [8, 32], strides = [1, 1]} : vector<8x128xf32> to vector<8x32xf32>
    %147 = vector.extract_strided_slice %142 {offsets = [0, 96], sizes = [8, 32], strides = [1, 1]} : vector<8x128xf32> to vector<8x32xf32>
    %148 = arith.mulf %145, %132 : vector<8x32xf32>
    %149 = arith.mulf %144, %146 : vector<8x32xf32>
    %150 = arith.addf %148, %149 : vector<8x32xf32>
    %151 = math.tanh %150 : vector<8x32xf32>
    %152 = arith.mulf %147, %151 : vector<8x32xf32>
    %c0_25 = arith.constant 0 : index
    %c0_26 = arith.constant 0 : index
    %153 = vector.load %arg4[%c0_25, %c0_26] : memref<32x128xf32, #tpu.memory_space<vmem>>, vector<32x128xf32>
    %cst_27 = arith.constant dense<0.000000e+00> : vector<8x128xf32>
    %154 = tpu.matmul %152, %153, %cst_27 {dimension_numbers = #tpu.dot_dimension_numbers<[1], [0], [0], [1], [0, 0, 1, 1], [], []>} : vector<8x32xf32>, vector<32x128xf32>, vector<8x128xf32> -> vector<8x128xf32>
    %c0_28 = arith.constant 0 : index
    %c0_29 = arith.constant 0 : index
    %155 = vector.load %arg5[%c0_28, %c0_29] : memref<1x128xf32, #tpu.memory_space<vmem>>, vector<1x128xf32>
    %156 = vector.broadcast %155 : vector<1x128xf32> to vector<8x128xf32>
    %157 = arith.addf %154, %156 : vector<8x128xf32>
    %c0_30 = arith.constant 0 : index
    %c0_31 = arith.constant 0 : index
    %158 = vector.load %arg6[%c0_30, %c0_31] : memref<8x128xf32, #tpu.memory_space<vmem>>, vector<8x128xf32>
    tpu.vector_store %arg6[%c0_30, %c0_31], %157 {strides = array<i32>} : memref<8x128xf32, #tpu.memory_space<vmem>>, vector<8x128xf32>,
    return
  }
}

</mosaic_0001>

<llo_original>
// kernel: tpu_custom_call.1
$region0: #{tpu_custom_call.1}
  #allocation0 [shape = 'u32[]', space=smem, size = 0x4, offset = 0x4, fixed_abs, tag = 'smem constant byte address 0x4 - core index']
  #allocation1 [shape = 'u32[144,128]{1,0:T(1,128)}', space=vmem, size = 0x12000, scoped, tag = 'internal scratch']
  %s0 = inlined_call_operand.vmem [shape: f32[64,32], index: 0, kind: input, shape index: {}]
  %s1 = inlined_call_operand.vmem [shape: f32[32,128], index: 1, kind: input, shape index: {}]
  %s2 = inlined_call_operand.vmem [shape: f32[1,128], index: 2, kind: input, shape index: {}]
  %s3 = inlined_call_operand.vmem [shape: f32[32,128], index: 3, kind: input, shape index: {}]
  %s4 = inlined_call_operand.vmem [shape: f32[32,128], index: 4, kind: input, shape index: {}]
  %s5 = inlined_call_operand.vmem [shape: f32[1,128], index: 5, kind: input, shape index: {}]
  %s6 = inlined_call_operand.hbm [shape: f32[8,128], index: 6, kind: output, shape index: {}]
  %s7 = sld [smem:[#allocation0]]
  $region34: #{tpu_custom_call.1} parent=0
    _
  %s9 = ssub.s32 1, %s7
  %s10 = scalar_select 0, %s9, %s7
  $region1: #{tpu_custom_call.1} parent=0
    #allocation2 [shape = 'u8[4096]{0}', space=vmem, size = 0x1000, scoped, tag = 'output window, operand 0, single buffered']
    #allocation3 [shape = 's32[1]{0}', space=sflag, size = 0x4, scoped, tag = 'scoped memory for tpu_custom_call.1']
    %11 = vsyncpa [#allocation3], 0
    // Predicated region
    $region2: #{tpu_custom_call.1} parent=1 // pred_check
      _
    $region3: #{tpu_custom_call.1} parent=1 // pred_check_branch
      %13 = sbr.rel (0) target = $region5
    $region4: #{tpu_custom_call.1} parent=1 // pred_region
      _
    $region5: #{tpu_custom_call.1} parent=1 // pred_fallthru
      _
    // Predicated region
    $region6: #{tpu_custom_call.1} parent=1 // pred_check
      _
    $region7: #{tpu_custom_call.1} parent=1 // pred_check_branch
      %15 = sbr.rel (0) target = $region9
    $region8: #{tpu_custom_call.1} parent=1 // pred_region
      _
    $region9: #{tpu_custom_call.1} parent=1 // pred_fallthru
      _
    // Predicated region
    $region10: #{tpu_custom_call.1} parent=1 // pred_check
      _
    $region11: #{tpu_custom_call.1} parent=1 // pred_check_branch
      %17 = sbr.rel (0) target = $region13
    $region12: #{tpu_custom_call.1} parent=1 // pred_region
      _
    $region13: #{tpu_custom_call.1} parent=1 // pred_fallthru
      _
    // Predicated region
    $region14: #{tpu_custom_call.1} parent=1 // pred_check
      _
    $region15: #{tpu_custom_call.1} parent=1 // pred_check_branch
      %19 = sbr.rel (0) target = $region17
    $region16: #{tpu_custom_call.1} parent=1 // pred_region
      _
    $region17: #{tpu_custom_call.1} parent=1 // pred_fallthru
      _
    // Predicated region
    $region18: #{tpu_custom_call.1} parent=1 // pred_check
      _
    $region19: #{tpu_custom_call.1} parent=1 // pred_check_branch
      %21 = sbr.rel (0) target = $region21
    $region20: #{tpu_custom_call.1} parent=1 // pred_region
      _
    $region21: #{tpu_custom_call.1} parent=1 // pred_fallthru
      _
    // Predicated region
    $region22: #{tpu_custom_call.1} parent=1 // pred_check
      _
    $region23: #{tpu_custom_call.1} parent=1 // pred_check_branch
      %23 = sbr.rel (0) target = $region25
    $region24: #{tpu_custom_call.1} parent=1 // pred_region
      _
    $region25: #{tpu_custom_call.1} parent=1 // pred_fallthru
      _
    %v24 = vld [vmem:[%s0] sm:$0xff]
    %v25 = vld [vmem:[%s0 + $0x8] sm:$0xff]
    %v26 = vld [vmem:[%s0 + $0x10] sm:$0xff]
    %v27 = vld [vmem:[%s0 + $0x18] sm:$0xff]
    %v28 = vld [vmem:[%s0 + $0x20] sm:$0xff]
    %v29 = vld [vmem:[%s0 + $0x28] sm:$0xff]
    %v30 = vld [vmem:[%s0 + $0x30] sm:$0xff]
    %v31 = vld [vmem:[%s0 + $0x38] sm:$0xff]
    %v32 = vld [vmem:[%s1] sm:$0xff]
    %v33 = vld [vmem:[%s1 + $0x8] sm:$0xff]
    %v34 = vld [vmem:[%s1 + $0x10] sm:$0xff]
    %v35 = vld [vmem:[%s1 + $0x18] sm:$0xff]
    %v36 = vld [vmem:[%s2] sm:$0x1]
    %v38 = vlaneseq
    %v39 = vshrl.u32 %v38, 7
    %v40 = vsub.s32 0, %v39
    %v41 = vrot.slane %v36, %v40
    %vm43 = vcmask 261120
    %v45 = vsel %vm43, %v24, 0
    %v48 = vsel %vm43, %v25, 0
    %v51 = vsel %vm43, %v26, 0
    %v54 = vsel %vm43, %v27, 0
    %v57 = vsel %vm43, %v28, 0
    %v60 = vsel %vm43, %v29, 0
    %v63 = vsel %vm43, %v30, 0
    %v66 = vsel %vm43, %v31, 0
    %68 = vmatprep.subr.mxu0 0.0
    %69 = vmatpush1.msra.mxu0 %v32
    %70 = vmatprep.subr.mxu0 0.0
    %71 = vmatpush1.msra.mxu0 %v33
    %72 = vmatprep.subr.mxu0 0.0
    %73 = vmatpush1.msra.mxu0 %v34
    %74 = vmatprep.subr.mxu0 0.0
    %75 = vmatpush1.msra.mxu0 %v35
    %76 = vmatprep.subr.mxu0 0.0
    %77 = vmatpush1.msra.mxu0 0.0
    %78 = vmatprep.subr.mxu0 0.0
    %79 = vmatpush1.msra.mxu0 0.0
    %80 = vmatprep.subr.mxu0 0.0
    %81 = vmatpush1.msra.mxu0 0.0
    %82 = vmatprep.subr.mxu0 0.0
    %83 = vmatpush1.msra.mxu0 0.0
    %84 = vmatprep.subr.mxu0 0.0
    %85 = vmatpush1.msra.mxu0 0.0
    %86 = vmatprep.subr.mxu0 0.0
    %87 = vmatpush1.msra.mxu0 0.0
    %88 = vmatprep.subr.mxu0 0.0
    %89 = vmatpush1.msra.mxu0 0.0
    %90 = vmatprep.subr.mxu0 0.0
    %91 = vmatpush1.msra.mxu0 0.0
    %92 = vmatprep.subr.mxu0 0.0
    %93 = vmatpush1.msra.mxu0 0.0
    %94 = vmatprep.subr.mxu0 0.0
    %95 = vmatpush1.msra.mxu0 0.0
    %96 = vmatprep.subr.mxu0 0.0
    %97 = vmatpush1.msra.mxu0 0.0
    %98 = vmatprep.subr.mxu0 0.0
    %99 = vmatpush1.msra.mxu0 0.0
    %100 = vmatprep.subr.mxu0 0.0
    %101 = vmatpush1.msra.mxu0 0.0
    %102 = vmatprep.subr.mxu0 0.0
    %103 = vmatpush1.msra.mxu0 0.0
    %104 = vmatprep.subr.mxu0 0.0
    %105 = vmatpush1.msra.mxu0 0.0
    %106 = vmatprep.subr.mxu0 0.0
    %107 = vmatpush1.msra.mxu0 0.0
    %108 = vmatprep.subr.mxu0 0.0
    %109 = vmatpush1.msra.mxu0 0.0
    %110 = vmatprep.subr.mxu0 0.0
    %111 = vmatpush1.msra.mxu0 0.0
    %112 = vmatprep.subr.mxu0 0.0
    %113 = vmatpush1.msra.mxu0 0.0
    %114 = vmatprep.subr.mxu0 0.0
    %115 = vmatpush1.msra.mxu0 0.0
    %116 = vmatprep.subr.mxu0 0.0
    %117 = vmatpush1.msra.mxu0 0.0
    %118 = vmatprep.subr.mxu0 0.0
    %119 = vmatpush1.msra.mxu0 0.0
    %120 = vmatprep.subr.mxu0 0.0
    %121 = vmatpush1.msra.mxu0 0.0
    %122 = vmatprep.subr.mxu0 0.0
    %123 = vmatpush1.msra.mxu0 0.0
    %124 = vmatprep.subr.mxu0 0.0
    %125 = vmatpush1.msra.mxu0 0.0
    %126 = vmatprep.subr.mxu0 0.0
    %127 = vmatpush1.msra.mxu0 0.0
    %128 = vmatprep.subr.mxu0 0.0
    %129 = vmatpush1.msra.mxu0 0.0
    %130 = vmatprep.subr.mxu0 0.0
    %131 = vmatpush1.msra.mxu0 0.0
    %132 = vmatprep.mubr.f32.mxu0 0.0
    %133 = vmatmul.mubr.f32.gmra.mrb[0].mxu0 %v45
    %v134 = vpop.f32.mrb[0].mxu0
    %v135 = vadd.f32 %v41, %v134
    %v136 = vpop.f32.mrb[0].mxu0
    %137 = vmatprep.mubr.f32.mxu0 0.0
    %138 = vmatmul.mubr.f32.gmra.mrb[0].mxu0 %v48
    %v139 = vpop.f32.mrb[0].mxu0
    %v140 = vadd.f32 %v41, %v139
    %v141 = vpop.f32.mrb[0].mxu0
    %142 = vmatprep.mubr.f32.mxu0 0.0
    %143 = vmatmul.mubr.f32.gmra.mrb[0].mxu0 %v51
    %v144 = vpop.f32.mrb[0].mxu0
    %v145 = vadd.f32 %v41, %v144
    %v146 = vpop.f32.mrb[0].mxu0
    %147 = vmatprep.mubr.f32.mxu0 0.0
    %148 = vmatmul.mubr.f32.gmra.mrb[0].mxu0 %v54
    %v149 = vpop.f32.mrb[0].mxu0
    %v150 = vadd.f32 %v41, %v149
    %v151 = vpop.f32.mrb[0].mxu0
    %152 = vmatprep.mubr.f32.mxu0 0.0
    %153 = vmatmul.mubr.f32.gmra.mrb[0].mxu0 %v57
    %v154 = vpop.f32.mrb[0].mxu0
    %v155 = vadd.f32 %v41, %v154
    %v156 = vpop.f32.mrb[0].mxu0
    %157 = vmatprep.mubr.f32.mxu0 0.0
    %158 = vmatmul.mubr.f32.gmra.mrb[0].mxu0 %v60
    %v159 = vpop.f32.mrb[0].mxu0
    %v160 = vadd.f32 %v41, %v159
    %v161 = vpop.f32.mrb[0].mxu0
    %162 = vmatprep.mubr.f32.mxu0 0.0
    %163 = vmatmul.mubr.f32.gmra.mrb[0].mxu0 %v63
    %v164 = vpop.f32.mrb[0].mxu0
    %v165 = vadd.f32 %v41, %v164
    %v166 = vpop.f32.mrb[0].mxu0
    %167 = vmatprep.mubr.f32.mxu0 0.0
    %168 = vmatmul.mubr.f32.gmra.mrb[0].mxu0 %v66
    %v169 = vpop.f32.mrb[0].mxu0
    %v170 = vadd.f32 %v41, %v169
    %v171 = vpop.f32.mrb[0].mxu0
    %172 = vdwg.mxu0
    %v173 = vld [vmem:[%s3] sm:$0xff]
    %v174 = vld [vmem:[%s3 + $0x8] sm:$0xff]
    %v175 = vld [vmem:[%s3 + $0x10] sm:$0xff]
    %v176 = vld [vmem:[%s3 + $0x18] sm:$0xff]
    %v178 = vsel %vm43, 0.0, 0
    %180 = vmatprep.subr.mxu0 0.0
    %181 = vmatpush1.msra.mxu0 %v173
    %182 = vmatprep.subr.mxu0 0.0
    %183 = vmatpush1.msra.mxu0 %v174
    %184 = vmatprep.subr.mxu0 0.0
    %185 = vmatpush1.msra.mxu0 %v175
    %186 = vmatprep.subr.mxu0 0.0
    %187 = vmatpush1.msra.mxu0 %v176
    %188 = vmatprep.subr.mxu0 0.0
    %189 = vmatpush1.msra.mxu0 0.0
    %190 = vmatprep.subr.mxu0 0.0
    %191 = vmatpush1.msra.mxu0 0.0
    %192 = vmatprep.subr.mxu0 0.0
    %193 = vmatpush1.msra.mxu0 0.0
    %194 = vmatprep.subr.mxu0 0.0
    %195 = vmatpush1.msra.mxu0 0.0
    %196 = vmatprep.subr.mxu0 0.0
    %197 = vmatpush1.msra.mxu0 0.0
    %198 = vmatprep.subr.mxu0 0.0
    %199 = vmatpush1.msra.mxu0 0.0
    %200 = vmatprep.subr.mxu0 0.0
    %201 = vmatpush1.msra.mxu0 0.0
    %202 = vmatprep.subr.mxu0 0.0
    %203 = vmatpush1.msra.mxu0 0.0
    %204 = vmatprep.subr.mxu0 0.0
    %205 = vmatpush1.msra.mxu0 0.0
    %206 = vmatprep.subr.mxu0 0.0
    %207 = vmatpush1.msra.mxu0 0.0
    %208 = vmatprep.subr.mxu0 0.0
    %209 = vmatpush1.msra.mxu0 0.0
    %210 = vmatprep.subr.mxu0 0.0
    %211 = vmatpush1.msra.mxu0 0.0
    %212 = vmatprep.subr.mxu0 0.0
    %213 = vmatpush1.msra.mxu0 0.0
    %214 = vmatprep.subr.mxu0 0.0
    %215 = vmatpush1.msra.mxu0 0.0
    %216 = vmatprep.subr.mxu0 0.0
    %217 = vmatpush1.msra.mxu0 0.0
    %218 = vmatprep.subr.mxu0 0.0
    %219 = vmatpush1.msra.mxu0 0.0
    %220 = vmatprep.subr.mxu0 0.0
    %221 = vmatpush1.msra.mxu0 0.0
    %222 = vmatprep.subr.mxu0 0.0
    %223 = vmatpush1.msra.mxu0 0.0
    %224 = vmatprep.subr.mxu0 0.0
    %225 = vmatpush1.msra.mxu0 0.0
    %226 = vmatprep.subr.mxu0 0.0
    %227 = vmatpush1.msra.mxu0 0.0
    %228 = vmatprep.subr.mxu0 0.0
    %229 = vmatpush1.msra.mxu0 0.0
    %230 = vmatprep.subr.mxu0 0.0
    %231 = vmatpush1.msra.mxu0 0.0
    %232 = vmatprep.subr.mxu0 0.0
    %233 = vmatpush1.msra.mxu0 0.0
    %234 = vmatprep.subr.mxu0 0.0
    %235 = vmatpush1.msra.mxu0 0.0
    %236 = vmatprep.subr.mxu0 0.0
    %237 = vmatpush1.msra.mxu0 0.0
    %238 = vmatprep.subr.mxu0 0.0
    %239 = vmatpush1.msra.mxu0 0.0
    %240 = vmatprep.subr.mxu0 0.0
    %241 = vmatpush1.msra.mxu0 0.0
    %242 = vmatprep.subr.mxu0 0.0
    %243 = vmatpush1.msra.mxu0 0.0
    %244 = vmatprep.mubr.f32.mxu0 0.0
    %245 = vmatmul.mubr.f32.gmra.mrb[0].mxu0 %v178
    %v246 = vpop.f32.mrb[0].mxu0
    %v247 = vadd.f32 0.0, %v246
    %v248 = vpop.f32.mrb[0].mxu0
    %249 = vdwg.mxu0
    %v250 = vadd.f32 %v135, %v247
    %v251 = vxor.u32 %v250, 2147483648
    %v252 = vmul.f32 %v251, 1.442695
    %v253 = vpow.pop %v252
    %v254 = vadd.f32 %v253, 1.0
    %v255 = vrcp.pop %v254
    %v256 = vmul.f32 1.0, %v255
    %v257 = vtanh.pop %v250
    %v258 = vmul.f32 %v256, 0.0
    %260 = vrot.lane.b32.xlu0 %v257, 64
    %v261 = vpop.permute.xlu0 %260
    %v263 = vmul.f32 %v256, %v261
    %265 = vrot.lane.b32.xlu0 %v263, 32
    %v266 = vpop.permute.xlu0 %265
    %v268 = vadd.f32 %v258, %v266
    %v269 = vtanh.pop %v268
    %271 = vrot.lane.b32.xlu0 %v269, 64
    %v272 = vpop.permute.xlu0 %271
    %v274 = vmul.f32 %v256, %v272
    %276 = vrot.lane.b32.xlu0 %v274, 32
    %v277 = vpop.permute.xlu0 %276
    %v278 = vsel %vm43, %v277, 0
    %280 = vmatprep.subr.mxu0 0.0
    %281 = vmatpush1.msra.mxu0 %v173
    %282 = vmatprep.subr.mxu0 0.0
    %283 = vmatpush1.msra.mxu0 %v174
    %284 = vmatprep.subr.mxu0 0.0
    %285 = vmatpush1.msra.mxu0 %v175
    %286 = vmatprep.subr.mxu0 0.0
    %287 = vmatpush1.msra.mxu0 %v176
    %288 = vmatprep.subr.mxu0 0.0
    %289 = vmatpush1.msra.mxu0 0.0
    %290 = vmatprep.subr.mxu0 0.0
    %291 = vmatpush1.msra.mxu0 0.0
    %292 = vmatprep.subr.mxu0 0.0
    %293 = vmatpush1.msra.mxu0 0.0
    %294 = vmatprep.subr.mxu0 0.0
    %295 = vmatpush1.msra.mxu0 0.0
    %296 = vmatprep.subr.mxu0 0.0
    %297 = vmatpush1.msra.mxu0 0.0
    %298 = vmatprep.subr.mxu0 0.0
    %299 = vmatpush1.msra.mxu0 0.0
    %300 = vmatprep.subr.mxu0 0.0
    %301 = vmatpush1.msra.mxu0 0.0
    %302 = vmatprep.subr.mxu0 0.0
    %303 = vmatpush1.msra.mxu0 0.0
    %304 = vmatprep.subr.mxu0 0.0
    %305 = vmatpush1.msra.mxu0 0.0
    %306 = vmatprep.subr.mxu0 0.0
    %307 = vmatpush1.msra.mxu0 0.0
    %308 = vmatprep.subr.mxu0 0.0
    %309 = vmatpush1.msra.mxu0 0.0
    %310 = vmatprep.subr.mxu0 0.0
    %311 = vmatpush1.msra.mxu0 0.0
    %312 = vmatprep.subr.mxu0 0.0
    %313 = vmatpush1.msra.mxu0 0.0
    %314 = vmatprep.subr.mxu0 0.0
    %315 = vmatpush1.msra.mxu0 0.0
    %316 = vmatprep.subr.mxu0 0.0
    %317 = vmatpush1.msra.mxu0 0.0
    %318 = vmatprep.subr.mxu0 0.0
    %319 = vmatpush1.msra.mxu0 0.0
    %320 = vmatprep.subr.mxu0 0.0
    %321 = vmatpush1.msra.mxu0 0.0
    %322 = vmatprep.subr.mxu0 0.0
    %323 = vmatpush1.msra.mxu0 0.0
    %324 = vmatprep.subr.mxu0 0.0
    %325 = vmatpush1.msra.mxu0 0.0
    %326 = vmatprep.subr.mxu0 0.0
    %327 = vmatpush1.msra.mxu0 0.0
    %328 = vmatprep.subr.mxu0 0.0
    %329 = vmatpush1.msra.mxu0 0.0
    %330 = vmatprep.subr.mxu0 0.0
    %331 = vmatpush1.msra.mxu0 0.0
    %332 = vmatprep.subr.mxu0 0.0
    %333 = vmatpush1.msra.mxu0 0.0
    %334 = vmatprep.subr.mxu0 0.0
    %335 = vmatpush1.msra.mxu0 0.0
    %336 = vmatprep.subr.mxu0 0.0
    %337 = vmatpush1.msra.mxu0 0.0
    %338 = vmatprep.subr.mxu0 0.0
    %339 = vmatpush1.msra.mxu0 0.0
    %340 = vmatprep.subr.mxu0 0.0
    %341 = vmatpush1.msra.mxu0 0.0
    %342 = vmatprep.subr.mxu0 0.0
    %343 = vmatpush1.msra.mxu0 0.0
    %344 = vmatprep.mubr.f32.mxu0 0.0
    %345 = vmatmul.mubr.f32.gmra.mrb[0].mxu0 %v278
    %v346 = vpop.f32.mrb[0].mxu0
    %v347 = vadd.f32 0.0, %v346
    %v348 = vpop.f32.mrb[0].mxu0
    %349 = vdwg.mxu0
    %v350 = vadd.f32 %v140, %v347
    %v351 = vxor.u32 %v350, 2147483648
    %v352 = vmul.f32 %v351, 1.442695
    %v353 = vpow.pop %v352
    %v354 = vadd.f32 %v353, 1.0
    %v355 = vrcp.pop %v354
    %v356 = vmul.f32 1.0, %v355
    %v357 = vtanh.pop %v350
    %v358 = vmul.f32 %v356, %v268
    %360 = vrot.lane.b32.xlu0 %v357, 64
    %v361 = vpop.permute.xlu0 %360
    %v363 = vmul.f32 %v356, %v361
    %365 = vrot.lane.b32.xlu0 %v363, 32
    %v366 = vpop.permute.xlu0 %365
    %v368 = vadd.f32 %v358, %v366
    %v369 = vtanh.pop %v368
    %371 = vrot.lane.b32.xlu0 %v369, 64
    %v372 = vpop.permute.xlu0 %371
    %v374 = vmul.f32 %v356, %v372
    %376 = vrot.lane.b32.xlu0 %v374, 32
    %v377 = vpop.permute.xlu0 %376
    %v378 = vsel %vm43, %v377, 0
    %380 = vmatprep.subr.mxu0 0.0
    %381 = vmatpush1.msra.mxu0 %v173
    %382 = vmatprep.subr.mxu0 0.0
    %383 = vmatpush1.msra.mxu0 %v174
    %384 = vmatprep.subr.mxu0 0.0
    %385 = vmatpush1.msra.mxu0 %v175
    %386 = vmatprep.subr.mxu0 0.0
    %387 = vmatpush1.msra.mxu0 %v176
    %388 = vmatprep.subr.mxu0 0.0
    %389 = vmatpush1.msra.mxu0 0.0
    %390 = vmatprep.subr.mxu0 0.0
    %391 = vmatpush1.msra.mxu0 0.0
    %392 = vmatprep.subr.mxu0 0.0
    %393 = vmatpush1.msra.mxu0 0.0
    %394 = vmatprep.subr.mxu0 0.0
    %395 = vmatpush1.msra.mxu0 0.0
    %396 = vmatprep.subr.mxu0 0.0
    %397 = vmatpush1.msra.mxu0 0.0
    %398 = vmatprep.subr.mxu0 0.0
    %399 = vmatpush1.msra.mxu0 0.0
    %400 = vmatprep.subr.mxu0 0.0
    %401 = vmatpush1.msra.mxu0 0.0
    %402 = vmatprep.subr.mxu0 0.0
    %403 = vmatpush1.msra.mxu0 0.0
    %404 = vmatprep.subr.mxu0 0.0
    %405 = vmatpush1.msra.mxu0 0.0
    %406 = vmatprep.subr.mxu0 0.0
    %407 = vmatpush1.msra.mxu0 0.0
    %408 = vmatprep.subr.mxu0 0.0
    %409 = vmatpush1.msra.mxu0 0.0
    %410 = vmatprep.subr.mxu0 0.0
    %411 = vmatpush1.msra.mxu0 0.0
    %412 = vmatprep.subr.mxu0 0.0
    %413 = vmatpush1.msra.mxu0 0.0
    %414 = vmatprep.subr.mxu0 0.0
    %415 = vmatpush1.msra.mxu0 0.0
    %416 = vmatprep.subr.mxu0 0.0
    %417 = vmatpush1.msra.mxu0 0.0
    %418 = vmatprep.subr.mxu0 0.0
    %419 = vmatpush1.msra.mxu0 0.0
    %420 = vmatprep.subr.mxu0 0.0
    %421 = vmatpush1.msra.mxu0 0.0
    %422 = vmatprep.subr.mxu0 0.0
    %423 = vmatpush1.msra.mxu0 0.0
    %424 = vmatprep.subr.mxu0 0.0
    %425 = vmatpush1.msra.mxu0 0.0
    %426 = vmatprep.subr.mxu0 0.0
    %427 = vmatpush1.msra.mxu0 0.0
    %428 = vmatprep.subr.mxu0 0.0
    %429 = vmatpush1.msra.mxu0 0.0
    %430 = vmatprep.subr.mxu0 0.0
    %431 = vmatpush1.msra.mxu0 0.0
    %432 = vmatprep.subr.mxu0 0.0
    %433 = vmatpush1.msra.mxu0 0.0
    %434 = vmatprep.subr.mxu0 0.0
    %435 = vmatpush1.msra.mxu0 0.0
    %436 = vmatprep.subr.mxu0 0.0
    %437 = vmatpush1.msra.mxu0 0.0
    %438 = vmatprep.subr.mxu0 0.0
    %439 = vmatpush1.msra.mxu0 0.0
    %440 = vmatprep.subr.mxu0 0.0
    %441 = vmatpush1.msra.mxu0 0.0
    %442 = vmatprep.subr.mxu0 0.0
    %443 = vmatpush1.msra.mxu0 0.0
    %444 = vmatprep.mubr.f32.mxu0 0.0
    %445 = vmatmul.mubr.f32.gmra.mrb[0].mxu0 %v378
    %v446 = vpop.f32.mrb[0].mxu0
    %v447 = vadd.f32 0.0, %v446
    %v448 = vpop.f32.mrb[0].mxu0
    %449 = vdwg.mxu0
    %v450 = vadd.f32 %v145, %v447
    %v451 = vxor.u32 %v450, 2147483648
    %v452 = vmul.f32 %v451, 1.442695
    %v453 = vpow.pop %v452
    %v454 = vadd.f32 %v453, 1.0
    %v455 = vrcp.pop %v454
    %v456 = vmul.f32 1.0, %v455
    %v457 = vtanh.pop %v450
    %v458 = vmul.f32 %v456, %v368
    %460 = vrot.lane.b32.xlu0 %v457, 64
    %v461 = vpop.permute.xlu0 %460
    %v463 = vmul.f32 %v456, %v461
    %465 = vrot.lane.b32.xlu0 %v463, 32
    %v466 = vpop.permute.xlu0 %465
    %v468 = vadd.f32 %v458, %v466
    %v469 = vtanh.pop %v468
    %471 = vrot.lane.b32.xlu0 %v469, 64
    %v472 = vpop.permute.xlu0 %471
    %v474 = vmul.f32 %v456, %v472
    %476 = vrot.lane.b32.xlu0 %v474, 32
    %v477 = vpop.permute.xlu0 %476
    %v478 = vsel %vm43, %v477, 0
    %480 = vmatprep.subr.mxu0 0.0
    %481 = vmatpush1.msra.mxu0 %v173
    %482 = vmatprep.subr.mxu0 0.0
    %483 = vmatpush1.msra.mxu0 %v174
    %484 = vmatprep.subr.mxu0 0.0
    %485 = vmatpush1.msra.mxu0 %v175
    %486 = vmatprep.subr.mxu0 0.0
    %487 = vmatpush1.msra.mxu0 %v176
    %488 = vmatprep.subr.mxu0 0.0
    %489 = vmatpush1.msra.mxu0 0.0
    %490 = vmatprep.subr.mxu0 0.0
    %491 = vmatpush1.msra.mxu0 0.0
    %492 = vmatprep.subr.mxu0 0.0
    %493 = vmatpush1.msra.mxu0 0.0
    %494 = vmatprep.subr.mxu0 0.0
    %495 = vmatpush1.msra.mxu0 0.0
    %496 = vmatprep.subr.mxu0 0.0
    %497 = vmatpush1.msra.mxu0 0.0
    %498 = vmatprep.subr.mxu0 0.0
    %499 = vmatpush1.msra.mxu0 0.0
    %500 = vmatprep.subr.mxu0 0.0
    %501 = vmatpush1.msra.mxu0 0.0
    %502 = vmatprep.subr.mxu0 0.0
    %503 = vmatpush1.msra.mxu0 0.0
    %504 = vmatprep.subr.mxu0 0.0
    %505 = vmatpush1.msra.mxu0 0.0
    %506 = vmatprep.subr.mxu0 0.0
    %507 = vmatpush1.msra.mxu0 0.0
    %508 = vmatprep.subr.mxu0 0.0
    %509 = vmatpush1.msra.mxu0 0.0
    %510 = vmatprep.subr.mxu0 0.0
    %511 = vmatpush1.msra.mxu0 0.0
    %512 = vmatprep.subr.mxu0 0.0
    %513 = vmatpush1.msra.mxu0 0.0
    %514 = vmatprep.subr.mxu0 0.0
    %515 = vmatpush1.msra.mxu0 0.0
    %516 = vmatprep.subr.mxu0 0.0
    %517 = vmatpush1.msra.mxu0 0.0
    %518 = vmatprep.subr.mxu0 0.0
    %519 = vmatpush1.msra.mxu0 0.0
    %520 = vmatprep.subr.mxu0 0.0
    %521 = vmatpush1.msra.mxu0 0.0
    %522 = vmatprep.subr.mxu0 0.0
    %523 = vmatpush1.msra.mxu0 0.0
    %524 = vmatprep.subr.mxu0 0.0
    %525 = vmatpush1.msra.mxu0 0.0
    %526 = vmatprep.subr.mxu0 0.0
    %527 = vmatpush1.msra.mxu0 0.0
    %528 = vmatprep.subr.mxu0 0.0
    %529 = vmatpush1.msra.mxu0 0.0
    %530 = vmatprep.subr.mxu0 0.0
    %531 = vmatpush1.msra.mxu0 0.0
    %532 = vmatprep.subr.mxu0 0.0
    %533 = vmatpush1.msra.mxu0 0.0
    %534 = vmatprep.subr.mxu0 0.0
    %535 = vmatpush1.msra.mxu0 0.0
    %536 = vmatprep.subr.mxu0 0.0
    %537 = vmatpush1.msra.mxu0 0.0
    %538 = vmatprep.subr.mxu0 0.0
    %539 = vmatpush1.msra.mxu0 0.0
    %540 = vmatprep.subr.mxu0 0.0
    %541 = vmatpush1.msra.mxu0 0.0
    %542 = vmatprep.subr.mxu0 0.0
    %543 = vmatpush1.msra.mxu0 0.0
    %544 = vmatprep.mubr.f32.mxu0 0.0
    %545 = vmatmul.mubr.f32.gmra.mrb[0].mxu0 %v478
    %v546 = vpop.f32.mrb[0].mxu0
    %v547 = vadd.f32 0.0, %v546
    %v548 = vpop.f32.mrb[0].mxu0
    %549 = vdwg.mxu0
    %v550 = vadd.f32 %v150, %v547
    %v551 = vxor.u32 %v550, 2147483648
    %v552 = vmul.f32 %v551, 1.442695
    %v553 = vpow.pop %v552
    %v554 = vadd.f32 %v553, 1.0
    %v555 = vrcp.pop %v554
    %v556 = vmul.f32 1.0, %v555
    %v557 = vtanh.pop %v550
    %v558 = vmul.f32 %v556, %v468
    %560 = vrot.lane.b32.xlu0 %v557, 64
    %v561 = vpop.permute.xlu0 %560
    %v563 = vmul.f32 %v556, %v561
    %565 = vrot.lane.b32.xlu0 %v563, 32
    %v566 = vpop.permute.xlu0 %565
    %v568 = vadd.f32 %v558, %v566
    %v569 = vtanh.pop %v568
    %571 = vrot.lane.b32.xlu0 %v569, 64
    %v572 = vpop.permute.xlu0 %571
    %v574 = vmul.f32 %v556, %v572
    %576 = vrot.lane.b32.xlu0 %v574, 32
    %v577 = vpop.permute.xlu0 %576
    %v578 = vsel %vm43, %v577, 0
    %580 = vmatprep.subr.mxu0 0.0
    %581 = vmatpush1.msra.mxu0 %v173
    %582 = vmatprep.subr.mxu0 0.0
    %583 = vmatpush1.msra.mxu0 %v174
    %584 = vmatprep.subr.mxu0 0.0
    %585 = vmatpush1.msra.mxu0 %v175
    %586 = vmatprep.subr.mxu0 0.0
    %587 = vmatpush1.msra.mxu0 %v176
    %588 = vmatprep.subr.mxu0 0.0
    %589 = vmatpush1.msra.mxu0 0.0
    %590 = vmatprep.subr.mxu0 0.0
    %591 = vmatpush1.msra.mxu0 0.0
    %592 = vmatprep.subr.mxu0 0.0
    %593 = vmatpush1.msra.mxu0 0.0
    %594 = vmatprep.subr.mxu0 0.0
    %595 = vmatpush1.msra.mxu0 0.0
    %596 = vmatprep.subr.mxu0 0.0
    %597 = vmatpush1.msra.mxu0 0.0
    %598 = vmatprep.subr.mxu0 0.0
    %599 = vmatpush1.msra.mxu0 0.0
    %600 = vmatprep.subr.mxu0 0.0
    %601 = vmatpush1.msra.mxu0 0.0
    %602 = vmatprep.subr.mxu0 0.0
    %603 = vmatpush1.msra.mxu0 0.0
    %604 = vmatprep.subr.mxu0 0.0
    %605 = vmatpush1.msra.mxu0 0.0
    %606 = vmatprep.subr.mxu0 0.0
    %607 = vmatpush1.msra.mxu0 0.0
    %608 = vmatprep.subr.mxu0 0.0
    %609 = vmatpush1.msra.mxu0 0.0
    %610 = vmatprep.subr.mxu0 0.0
    %611 = vmatpush1.msra.mxu0 0.0
    %612 = vmatprep.subr.mxu0 0.0
    %613 = vmatpush1.msra.mxu0 0.0
    %614 = vmatprep.subr.mxu0 0.0
    %615 = vmatpush1.msra.mxu0 0.0
    %616 = vmatprep.subr.mxu0 0.0
    %617 = vmatpush1.msra.mxu0 0.0
    %618 = vmatprep.subr.mxu0 0.0
    %619 = vmatpush1.msra.mxu0 0.0
    %620 = vmatprep.subr.mxu0 0.0
    %621 = vmatpush1.msra.mxu0 0.0
    %622 = vmatprep.subr.mxu0 0.0
    %623 = vmatpush1.msra.mxu0 0.0
    %624 = vmatprep.subr.mxu0 0.0
    %625 = vmatpush1.msra.mxu0 0.0
    %626 = vmatprep.subr.mxu0 0.0
    %627 = vmatpush1.msra.mxu0 0.0
    %628 = vmatprep.subr.mxu0 0.0
    %629 = vmatpush1.msra.mxu0 0.0
    %630 = vmatprep.subr.mxu0 0.0
    %631 = vmatpush1.msra.mxu0 0.0
    %632 = vmatprep.subr.mxu0 0.0
    %633 = vmatpush1.msra.mxu0 0.0
    %634 = vmatprep.subr.mxu0 0.0
    %635 = vmatpush1.msra.mxu0 0.0
    %636 = vmatprep.subr.mxu0 0.0
    %637 = vmatpush1.msra.mxu0 0.0
    %638 = vmatprep.subr.mxu0 0.0
    %639 = vmatpush1.msra.mxu0 0.0
    %640 = vmatprep.subr.mxu0 0.0
    %641 = vmatpush1.msra.mxu0 0.0
    %642 = vmatprep.subr.mxu0 0.0
    %643 = vmatpush1.msra.mxu0 0.0
    %644 = vmatprep.mubr.f32.mxu0 0.0
    %645 = vmatmul.mubr.f32.gmra.mrb[0].mxu0 %v578
    %v646 = vpop.f32.mrb[0].mxu0
    %v647 = vadd.f32 0.0, %v646
    %v648 = vpop.f32.mrb[0].mxu0
    %649 = vdwg.mxu0
    %v650 = vadd.f32 %v155, %v647
    %v651 = vxor.u32 %v650, 2147483648
    %v652 = vmul.f32 %v651, 1.442695
    %v653 = vpow.pop %v652
    %v654 = vadd.f32 %v653, 1.0
    %v655 = vrcp.pop %v654
    %v656 = vmul.f32 1.0, %v655
    %v657 = vtanh.pop %v650
    %v658 = vmul.f32 %v656, %v568
    %660 = vrot.lane.b32.xlu0 %v657, 64
    %v661 = vpop.permute.xlu0 %660
    %v663 = vmul.f32 %v656, %v661
    %665 = vrot.lane.b32.xlu0 %v663, 32
    %v666 = vpop.permute.xlu0 %665
    %v668 = vadd.f32 %v658, %v666
    %v669 = vtanh.pop %v668
    %671 = vrot.lane.b32.xlu0 %v669, 64
    %v672 = vpop.permute.xlu0 %671
    %v674 = vmul.f32 %v656, %v672
    %676 = vrot.lane.b32.xlu0 %v674, 32
    %v677 = vpop.permute.xlu0 %676
    %v678 = vsel %vm43, %v677, 0
    %680 = vmatprep.subr.mxu0 0.0
    %681 = vmatpush1.msra.mxu0 %v173
    %682 = vmatprep.subr.mxu0 0.0
    %683 = vmatpush1.msra.mxu0 %v174
    %684 = vmatprep.subr.mxu0 0.0
    %685 = vmatpush1.msra.mxu0 %v175
    %686 = vmatprep.subr.mxu0 0.0
    %687 = vmatpush1.msra.mxu0 %v176
    %688 = vmatprep.subr.mxu0 0.0
    %689 = vmatpush1.msra.mxu0 0.0
    %690 = vmatprep.subr.mxu0 0.0
    %691 = vmatpush1.msra.mxu0 0.0
    %692 = vmatprep.subr.mxu0 0.0
    %693 = vmatpush1.msra.mxu0 0.0
    %694 = vmatprep.subr.mxu0 0.0
    %695 = vmatpush1.msra.mxu0 0.0
    %696 = vmatprep.subr.mxu0 0.0
    %697 = vmatpush1.msra.mxu0 0.0
    %698 = vmatprep.subr.mxu0 0.0
    %699 = vmatpush1.msra.mxu0 0.0
    %700 = vmatprep.subr.mxu0 0.0
    %701 = vmatpush1.msra.mxu0 0.0
    %702 = vmatprep.subr.mxu0 0.0
    %703 = vmatpush1.msra.mxu0 0.0
    %704 = vmatprep.subr.mxu0 0.0
    %705 = vmatpush1.msra.mxu0 0.0
    %706 = vmatprep.subr.mxu0 0.0
    %707 = vmatpush1.msra.mxu0 0.0
    %708 = vmatprep.subr.mxu0 0.0
    %709 = vmatpush1.msra.mxu0 0.0
    %710 = vmatprep.subr.mxu0 0.0
    %711 = vmatpush1.msra.mxu0 0.0
    %712 = vmatprep.subr.mxu0 0.0
    %713 = vmatpush1.msra.mxu0 0.0
    %714 = vmatprep.subr.mxu0 0.0
    %715 = vmatpush1.msra.mxu0 0.0
    %716 = vmatprep.subr.mxu0 0.0
    %717 = vmatpush1.msra.mxu0 0.0
    %718 = vmatprep.subr.mxu0 0.0
    %719 = vmatpush1.msra.mxu0 0.0
    %720 = vmatprep.subr.mxu0 0.0
    %721 = vmatpush1.msra.mxu0 0.0
    %722 = vmatprep.subr.mxu0 0.0
    %723 = vmatpush1.msra.mxu0 0.0
    %724 = vmatprep.subr.mxu0 0.0
    %725 = vmatpush1.msra.mxu0 0.0
    %726 = vmatprep.subr.mxu0 0.0
    %727 = vmatpush1.msra.mxu0 0.0
    %728 = vmatprep.subr.mxu0 0.0
    %729 = vmatpush1.msra.mxu0 0.0
    %730 = vmatprep.subr.mxu0 0.0
    %731 = vmatpush1.msra.mxu0 0.0
    %732 = vmatprep.subr.mxu0 0.0
    %733 = vmatpush1.msra.mxu0 0.0
    %734 = vmatprep.subr.mxu0 0.0
    %735 = vmatpush1.msra.mxu0 0.0
    %736 = vmatprep.subr.mxu0 0.0
    %737 = vmatpush1.msra.mxu0 0.0
    %738 = vmatprep.subr.mxu0 0.0
    %739 = vmatpush1.msra.mxu0 0.0
    %740 = vmatprep.subr.mxu0 0.0
    %741 = vmatpush1.msra.mxu0 0.0
    %742 = vmatprep.subr.mxu0 0.0
    %743 = vmatpush1.msra.mxu0 0.0
    %744 = vmatprep.mubr.f32.mxu0 0.0
    %745 = vmatmul.mubr.f32.gmra.mrb[0].mxu0 %v678
    %v746 = vpop.f32.mrb[0].mxu0
    %v747 = vadd.f32 0.0, %v746
    %v748 = vpop.f32.mrb[0].mxu0
    %749 = vdwg.mxu0
    %v750 = vadd.f32 %v160, %v747
    %v751 = vxor.u32 %v750, 2147483648
    %v752 = vmul.f32 %v751, 1.442695
    %v753 = vpow.pop %v752
    %v754 = vadd.f32 %v753, 1.0
    %v755 = vrcp.pop %v754
    %v756 = vmul.f32 1.0, %v755
    %v757 = vtanh.pop %v750
    %v758 = vmul.f32 %v756, %v668
    %760 = vrot.lane.b32.xlu0 %v757, 64
    %v761 = vpop.permute.xlu0 %760
    %v763 = vmul.f32 %v756, %v761
    %765 = vrot.lane.b32.xlu0 %v763, 32
    %v766 = vpop.permute.xlu0 %765
    %v768 = vadd.f32 %v758, %v766
    %v769 = vtanh.pop %v768
    %771 = vrot.lane.b32.xlu0 %v769, 64
    %v772 = vpop.permute.xlu0 %771
    %v774 = vmul.f32 %v756, %v772
    %776 = vrot.lane.b32.xlu0 %v774, 32
    %v777 = vpop.permute.xlu0 %776
    %v778 = vsel %vm43, %v777, 0
    %780 = vmatprep.subr.mxu0 0.0
    %781 = vmatpush1.msra.mxu0 %v173
    %782 = vmatprep.subr.mxu0 0.0
    %783 = vmatpush1.msra.mxu0 %v174
    %784 = vmatprep.subr.mxu0 0.0
    %785 = vmatpush1.msra.mxu0 %v175
    %786 = vmatprep.subr.mxu0 0.0
    %787 = vmatpush1.msra.mxu0 %v176
    %788 = vmatprep.subr.mxu0 0.0
    %789 = vmatpush1.msra.mxu0 0.0
    %790 = vmatprep.subr.mxu0 0.0
    %791 = vmatpush1.msra.mxu0 0.0
    %792 = vmatprep.subr.mxu0 0.0
    %793 = vmatpush1.msra.mxu0 0.0
    %794 = vmatprep.subr.mxu0 0.0
    %795 = vmatpush1.msra.mxu0 0.0
    %796 = vmatprep.subr.mxu0 0.0
    %797 = vmatpush1.msra.mxu0 0.0
    %798 = vmatprep.subr.mxu0 0.0
    %799 = vmatpush1.msra.mxu0 0.0
    %800 = vmatprep.subr.mxu0 0.0
    %801 = vmatpush1.msra.mxu0 0.0
    %802 = vmatprep.subr.mxu0 0.0
    %803 = vmatpush1.msra.mxu0 0.0
    %804 = vmatprep.subr.mxu0 0.0
    %805 = vmatpush1.msra.mxu0 0.0
    %806 = vmatprep.subr.mxu0 0.0
    %807 = vmatpush1.msra.mxu0 0.0
    %808 = vmatprep.subr.mxu0 0.0
    %809 = vmatpush1.msra.mxu0 0.0
    %810 = vmatprep.subr.mxu0 0.0
    %811 = vmatpush1.msra.mxu0 0.0
    %812 = vmatprep.subr.mxu0 0.0
    %813 = vmatpush1.msra.mxu0 0.0
    %814 = vmatprep.subr.mxu0 0.0
    %815 = vmatpush1.msra.mxu0 0.0
    %816 = vmatprep.subr.mxu0 0.0
    %817 = vmatpush1.msra.mxu0 0.0
    %818 = vmatprep.subr.mxu0 0.0
    %819 = vmatpush1.msra.mxu0 0.0
    %820 = vmatprep.subr.mxu0 0.0
    %821 = vmatpush1.msra.mxu0 0.0
    %822 = vmatprep.subr.mxu0 0.0
    %823 = vmatpush1.msra.mxu0 0.0
    %824 = vmatprep.subr.mxu0 0.0
    %825 = vmatpush1.msra.mxu0 0.0
    %826 = vmatprep.subr.mxu0 0.0
    %827 = vmatpush1.msra.mxu0 0.0
    %828 = vmatprep.subr.mxu0 0.0
    %829 = vmatpush1.msra.mxu0 0.0
    %830 = vmatprep.subr.mxu0 0.0
    %831 = vmatpush1.msra.mxu0 0.0
    %832 = vmatprep.subr.mxu0 0.0
    %833 = vmatpush1.msra.mxu0 0.0
    %834 = vmatprep.subr.mxu0 0.0
    %835 = vmatpush1.msra.mxu0 0.0
    %836 = vmatprep.subr.mxu0 0.0
    %837 = vmatpush1.msra.mxu0 0.0
    %838 = vmatprep.subr.mxu0 0.0
    %839 = vmatpush1.msra.mxu0 0.0
    %840 = vmatprep.subr.mxu0 0.0
    %841 = vmatpush1.msra.mxu0 0.0
    %842 = vmatprep.subr.mxu0 0.0
    %843 = vmatpush1.msra.mxu0 0.0
    %844 = vmatprep.mubr.f32.mxu0 0.0
    %845 = vmatmul.mubr.f32.gmra.mrb[0].mxu0 %v778
    %v846 = vpop.f32.mrb[0].mxu0
    %v847 = vadd.f32 0.0, %v846
    %v848 = vpop.f32.mrb[0].mxu0
    %849 = vdwg.mxu0
    %v850 = vadd.f32 %v165, %v847
    %v851 = vxor.u32 %v850, 2147483648
    %v852 = vmul.f32 %v851, 1.442695
    %v853 = vpow.pop %v852
    %v854 = vadd.f32 %v853, 1.0
    %v855 = vrcp.pop %v854
    %v856 = vmul.f32 1.0, %v855
    %v857 = vtanh.pop %v850
    %v858 = vmul.f32 %v856, %v768
    %860 = vrot.lane.b32.xlu0 %v857, 64
    %v861 = vpop.permute.xlu0 %860
    %v863 = vmul.f32 %v856, %v861
    %865 = vrot.lane.b32.xlu0 %v863, 32
    %v866 = vpop.permute.xlu0 %865
    %v868 = vadd.f32 %v858, %v866
    %v869 = vtanh.pop %v868
    %871 = vrot.lane.b32.xlu0 %v869, 64
    %v872 = vpop.permute.xlu0 %871
    %v874 = vmul.f32 %v856, %v872
    %876 = vrot.lane.b32.xlu0 %v874, 32
    %v877 = vpop.permute.xlu0 %876
    %v878 = vsel %vm43, %v877, 0
    %880 = vmatprep.subr.mxu0 0.0
    %881 = vmatpush1.msra.mxu0 %v173
    %882 = vmatprep.subr.mxu0 0.0
    %883 = vmatpush1.msra.mxu0 %v174
    %884 = vmatprep.subr.mxu0 0.0
    %885 = vmatpush1.msra.mxu0 %v175
    %886 = vmatprep.subr.mxu0 0.0
    %887 = vmatpush1.msra.mxu0 %v176
    %888 = vmatprep.subr.mxu0 0.0
    %889 = vmatpush1.msra.mxu0 0.0
    %890 = vmatprep.subr.mxu0 0.0
    %891 = vmatpush1.msra.mxu0 0.0
    %892 = vmatprep.subr.mxu0 0.0
    %893 = vmatpush1.msra.mxu0 0.0
    %894 = vmatprep.subr.mxu0 0.0
    %895 = vmatpush1.msra.mxu0 0.0
    %896 = vmatprep.subr.mxu0 0.0
    %897 = vmatpush1.msra.mxu0 0.0
    %898 = vmatprep.subr.mxu0 0.0
    %899 = vmatpush1.msra.mxu0 0.0
    %900 = vmatprep.subr.mxu0 0.0
    %901 = vmatpush1.msra.mxu0 0.0
    %902 = vmatprep.subr.mxu0 0.0
    %903 = vmatpush1.msra.mxu0 0.0
    %904 = vmatprep.subr.mxu0 0.0
    %905 = vmatpush1.msra.mxu0 0.0
    %906 = vmatprep.subr.mxu0 0.0
    %907 = vmatpush1.msra.mxu0 0.0
    %908 = vmatprep.subr.mxu0 0.0
    %909 = vmatpush1.msra.mxu0 0.0
    %910 = vmatprep.subr.mxu0 0.0
    %911 = vmatpush1.msra.mxu0 0.0
    %912 = vmatprep.subr.mxu0 0.0
    %913 = vmatpush1.msra.mxu0 0.0
    %914 = vmatprep.subr.mxu0 0.0
    %915 = vmatpush1.msra.mxu0 0.0
    %916 = vmatprep.subr.mxu0 0.0
    %917 = vmatpush1.msra.mxu0 0.0
    %918 = vmatprep.subr.mxu0 0.0
    %919 = vmatpush1.msra.mxu0 0.0
    %920 = vmatprep.subr.mxu0 0.0
    %921 = vmatpush1.msra.mxu0 0.0
    %922 = vmatprep.subr.mxu0 0.0
    %923 = vmatpush1.msra.mxu0 0.0
    %924 = vmatprep.subr.mxu0 0.0
    %925 = vmatpush1.msra.mxu0 0.0
    %926 = vmatprep.subr.mxu0 0.0
    %927 = vmatpush1.msra.mxu0 0.0
    %928 = vmatprep.subr.mxu0 0.0
    %929 = vmatpush1.msra.mxu0 0.0
    %930 = vmatprep.subr.mxu0 0.0
    %931 = vmatpush1.msra.mxu0 0.0
    %932 = vmatprep.subr.mxu0 0.0
    %933 = vmatpush1.msra.mxu0 0.0
    %934 = vmatprep.subr.mxu0 0.0
    %935 = vmatpush1.msra.mxu0 0.0
    %936 = vmatprep.subr.mxu0 0.0
    %937 = vmatpush1.msra.mxu0 0.0
    %938 = vmatprep.subr.mxu0 0.0
    %939 = vmatpush1.msra.mxu0 0.0
    %940 = vmatprep.subr.mxu0 0.0
    %941 = vmatpush1.msra.mxu0 0.0
    %942 = vmatprep.subr.mxu0 0.0
    %943 = vmatpush1.msra.mxu0 0.0
    %944 = vmatprep.mubr.f32.mxu0 0.0
    %945 = vmatmul.mubr.f32.gmra.mrb[0].mxu0 %v878
    %v946 = vpop.f32.mrb[0].mxu0
    %v947 = vadd.f32 0.0, %v946
    %v948 = vpop.f32.mrb[0].mxu0
    %949 = vdwg.mxu0
    %v950 = vadd.f32 %v170, %v947
    %v951 = vxor.u32 %v950, 2147483648
    %v952 = vmul.f32 %v951, 1.442695
    %v953 = vpow.pop %v952
    %v954 = vadd.f32 %v953, 1.0
    %v955 = vrcp.pop %v954
    %v956 = vmul.f32 1.0, %v955
    %v957 = vtanh.pop %v950
    %v958 = vmul.f32 %v956, %v868
    %960 = vrot.lane.b32.xlu0 %v957, 64
    %v961 = vpop.permute.xlu0 %960
    %v963 = vmul.f32 %v956, %v961
    %965 = vrot.lane.b32.xlu0 %v963, 32
    %v966 = vpop.permute.xlu0 %965
    %v968 = vadd.f32 %v958, %v966
    %v969 = vtanh.pop %v968
    %971 = vrot.lane.b32.xlu0 %v969, 64
    %v972 = vpop.permute.xlu0 %971
    %v974 = vmul.f32 %v956, %v972
    %v975 = vld [vmem:[%s4] sm:$0xff]
    %v976 = vld [vmem:[%s4 + $0x8] sm:$0xff]
    %v977 = vld [vmem:[%s4 + $0x10] sm:$0xff]
    %v978 = vld [vmem:[%s4 + $0x18] sm:$0xff]
    %v979 = vld [vmem:[%s5] sm:$0x1]
    %v981 = vlaneseq
    %v982 = vshrl.u32 %v981, 7
    %v983 = vsub.s32 0, %v982
    %v984 = vrot.slane %v979, %v983
    %987 = vrot.lane.b32.xlu0 %v974, 32
    %v988 = vpop.permute.xlu0 %987
    %v989 = vsel %vm43, %v988, 0
    %991 = vmatprep.subr.mxu0 0.0
    %992 = vmatpush1.msra.mxu0 %v975
    %993 = vmatprep.subr.mxu0 0.0
    %994 = vmatpush1.msra.mxu0 %v976
    %995 = vmatprep.subr.mxu0 0.0
    %996 = vmatpush1.msra.mxu0 %v977
    %997 = vmatprep.subr.mxu0 0.0
    %998 = vmatpush1.msra.mxu0 %v978
    %999 = vmatprep.subr.mxu0 0.0
    %1000 = vmatpush1.msra.mxu0 0.0
    %1001 = vmatprep.subr.mxu0 0.0
    %1002 = vmatpush1.msra.mxu0 0.0
    %1003 = vmatprep.subr.mxu0 0.0
    %1004 = vmatpush1.msra.mxu0 0.0
    %1005 = vmatprep.subr.mxu0 0.0
    %1006 = vmatpush1.msra.mxu0 0.0
    %1007 = vmatprep.subr.mxu0 0.0
    %1008 = vmatpush1.msra.mxu0 0.0
    %1009 = vmatprep.subr.mxu0 0.0
    %1010 = vmatpush1.msra.mxu0 0.0
    %1011 = vmatprep.subr.mxu0 0.0
    %1012 = vmatpush1.msra.mxu0 0.0
    %1013 = vmatprep.subr.mxu0 0.0
    %1014 = vmatpush1.msra.mxu0 0.0
    %1015 = vmatprep.subr.mxu0 0.0
    %1016 = vmatpush1.msra.mxu0 0.0
    %1017 = vmatprep.subr.mxu0 0.0
    %1018 = vmatpush1.msra.mxu0 0.0
    %1019 = vmatprep.subr.mxu0 0.0
    %1020 = vmatpush1.msra.mxu0 0.0
    %1021 = vmatprep.subr.mxu0 0.0
    %1022 = vmatpush1.msra.mxu0 0.0
    %1023 = vmatprep.subr.mxu0 0.0
    %1024 = vmatpush1.msra.mxu0 0.0
    %1025 = vmatprep.subr.mxu0 0.0
    %1026 = vmatpush1.msra.mxu0 0.0
    %1027 = vmatprep.subr.mxu0 0.0
    %1028 = vmatpush1.msra.mxu0 0.0
    %1029 = vmatprep.subr.mxu0 0.0
    %1030 = vmatpush1.msra.mxu0 0.0
    %1031 = vmatprep.subr.mxu0 0.0
    %1032 = vmatpush1.msra.mxu0 0.0
    %1033 = vmatprep.subr.mxu0 0.0
    %1034 = vmatpush1.msra.mxu0 0.0
    %1035 = vmatprep.subr.mxu0 0.0
    %1036 = vmatpush1.msra.mxu0 0.0
    %1037 = vmatprep.subr.mxu0 0.0
    %1038 = vmatpush1.msra.mxu0 0.0
    %1039 = vmatprep.subr.mxu0 0.0
    %1040 = vmatpush1.msra.mxu0 0.0
    %1041 = vmatprep.subr.mxu0 0.0
    %1042 = vmatpush1.msra.mxu0 0.0
    %1043 = vmatprep.subr.mxu0 0.0
    %1044 = vmatpush1.msra.mxu0 0.0
    %1045 = vmatprep.subr.mxu0 0.0
    %1046 = vmatpush1.msra.mxu0 0.0
    %1047 = vmatprep.subr.mxu0 0.0
    %1048 = vmatpush1.msra.mxu0 0.0
    %1049 = vmatprep.subr.mxu0 0.0
    %1050 = vmatpush1.msra.mxu0 0.0
    %1051 = vmatprep.subr.mxu0 0.0
    %1052 = vmatpush1.msra.mxu0 0.0
    %1053 = vmatprep.subr.mxu0 0.0
    %1054 = vmatpush1.msra.mxu0 0.0
    %1055 = vmatprep.mubr.f32.mxu0 0.0
    %1056 = vmatmul.mubr.f32.gmra.mrb[0].mxu0 %v989
    %v1057 = vpop.f32.mrb[0].mxu0
    %v1058 = vadd.f32 %v984, %v1057
    %v1059 = vpop.f32.mrb[0].mxu0
    %1060 = vdwg.mxu0
    %1061 = vst [vmem:[#allocation2] sm:$0xff] %v1058
    // Predicated region
    $region26: #{tpu_custom_call.1} parent=1 // pred_check
      _
    $region27: #{tpu_custom_call.1} parent=1 // pred_check_branch
      %1063 = sbr.rel (0) target = $region29
    $region28: #{tpu_custom_call.1} parent=1 // pred_region
      %s1065 = ssub.s32 128, 128
      %1066 = vsyncadd [#allocation3], %s1065
      %s1068 = sshll.u32 [#allocation2], 4
      %s1069 = int_to_ptr.vmem [resolvable:$true] %s1068
      %1071 = dma.vmem_to_hbm [thread:$0]  %s1069, 128, %s6, [#allocation3]
    $region29: #{tpu_custom_call.1} parent=1 // pred_fallthru
      _
    // Predicated region
    $region30: #{tpu_custom_call.1} parent=1 // pred_check
      _
    $region31: #{tpu_custom_call.1} parent=1 // pred_check_branch
      %1073 = sbr.rel (0) target = $region33
    $region32: #{tpu_custom_call.1} parent=1 // pred_region
      %1074 = dma.done [#allocation3], 128
    $region33: #{tpu_custom_call.1} parent=1 // pred_fallthru
      _
    %1075 = vsyncpa [#allocation3], 1

</llo_original>
